<compile_context>
chip_gen: v7x
topology: tpu7x:2x2x1
jax: 0.10.0
libtpu: 0.0.40
codegen_flags: <defaults>
</compile_context>

<pallas_src>
import functools

import jax
import jax.numpy as jnp
from jax.experimental import pallas as pl
from jax.experimental.pallas import tpu as pltpu


def _round_up(x, m):
    return ((x + m - 1) // m) * m


def _cdiv(a, b):
    return (a + b - 1) // b


def _pixelshuffle_down_kernel(x_ref, o_ref, t_ref, *, scale, th, ow):
    """One grid step of space-to-depth.

    x_ref : (TBC, TH*scale, W)           input block (W = full, uncropped width)
    o_ref : (TBC, scale*scale, TH, OW)   output block
    t_ref : (W, TBC*TH)                  VMEM scratch: rows transposed so the
                                         column de-interleave is sublane-strided
                                         (never lane-strided / masked gathers).
    """
    s = scale
    tbc = x_ref.shape[0]
    w = x_ref.shape[2]
    for si in range(s):
        # Sublane-strided gather of input rows h = th_*s + si  ->  (TBC, TH, W).
        rows = x_ref[:, pl.ds(si, th, s), :]
        # Merge (TBC, TH) -> TBC*TH (layout-preserving: TH is a multiple of the
        # dtype sublane packing) and move W onto sublanes with one 2-D XLU
        # transpose, so picking every s-th column below is a cheap
        # sublane-strided scratch read.
        t_ref[...] = rows.reshape(tbc * th, w).T          # (W, TBC*TH)
        for sj in range(s):
            sel_t = t_ref[pl.ds(sj, ow, s), :]            # (OW, TBC*TH)
            o_ref[:, si * s + sj, :, :] = sel_t.T.reshape(tbc, th, ow)


def _vmem_capacity_bytes():
    """Physical per-core VMEM (device-aware); conservative fallback = 64 MiB."""
    try:
        info = pltpu.get_tpu_info()
        cap = getattr(info, "vmem_capacity_bytes", None)
        if cap:
            return int(cap)
    except Exception:
        pass
    return 64 * 1024 * 1024


def _select_tiles(bc, oh, ow, w, scale, itemsize):
    """Pick (tbc, th, vmem_limit) from the VMEM budget + grid-step targets."""
    # Sublane packing of the dtype: 8 (f32), 16 (bf16), 32 (int8/fp8).
    packing = max(8, (32 // (8 * itemsize)) * 8)

    cap = _vmem_capacity_bytes()
    # v7x (64 MiB): ~45 MiB limit; v5e/v6e (128 MiB): ~90 MiB (well above the
    # 16/32 MiB default scoped limits).
    vmem_limit = min(int(cap * 0.70), 96 * 1024 * 1024)
    budget = int(vmem_limit * 0.70)

    # Live VMEM per unit of (tbc*th): 2x input block + 2x output block
    # (double-buffered by the auto-pipeline) + the single-buffered scratch.
    per_unit = itemsize * (2 * scale * w + 2 * scale * scale * ow + w)
    max_units = max(packing, budget // per_unit)

    oh_pad = _round_up(oh, packing)
    th = max(packing, min(oh_pad, (max_units // packing) * packing))
    tbc = max(1, min(bc, max_units // th))

    # Prefer >= 8 grid steps (DMA/compute pipelining; >= 4 steps per v7x core)
    # as long as blocks stay >= ~1 MiB of live VMEM.
    min_block = 1 << 20
    while _cdiv(bc, tbc) * _cdiv(oh, th) < 8:
        new_tbc = _cdiv(tbc, 2)
        new_th = max(packing, _round_up(_cdiv(th, 2), packing))
        if tbc > 1 and new_tbc * th * per_unit >= min_block:
            tbc = new_tbc
        elif new_th < th and tbc * new_th * per_unit >= min_block:
            th = new_th
        else:
            break

    # Headroom in case the minimum tile (tiny OH / huge W) exceeds the budget.
    vmem_limit = max(vmem_limit, tbc * th * per_unit + (8 << 20))
    return tbc, th, vmem_limit


def pixelshuffle_down(x, scale=2):
    """PixelShuffle_Down: (B, C, H, W) -> (B, C*scale^2, H//scale, W//scale)."""
    if scale == 1:
        return x
    b, c, h, w = x.shape
    s = scale
    oh, ow = h // s, w // s
    if oh == 0 or ow == 0:
        return jnp.zeros((b, c * s * s, oh, ow), x.dtype)
    bc = b * c

    # No host-side crop: this reshape of the *uncropped* tensor is contiguous
    # (free).  The strided reads inside the kernel only ever touch rows
    # < oh*s and columns < ow*s, so the cropped fringe is simply never read.
    x3 = x.reshape(bc, h, w)

    itemsize = jnp.dtype(x.dtype).itemsize
    tbc, th, vmem_limit = _select_tiles(bc, oh, ow, w, s, itemsize)
    grid = (_cdiv(bc, tbc), _cdiv(oh, th))

    kernel = functools.partial(_pixelshuffle_down_kernel, scale=s, th=th, ow=ow)
    bytes_accessed = itemsize * (bc * h * w + bc * s * s * oh * ow)

    out4 = pl.pallas_call(
        kernel,
        out_shape=jax.ShapeDtypeStruct((bc, s * s, oh, ow), x.dtype),
        grid=grid,
        in_specs=[pl.BlockSpec((tbc, th * s, w), lambda i, r: (i, r, 0))],
        out_specs=pl.BlockSpec((tbc, s * s, th, ow), lambda i, r: (i, 0, r, 0)),
        scratch_shapes=[pltpu.VMEM((w, tbc * th), x.dtype)],
        compiler_params=pltpu.CompilerParams(
            dimension_semantics=("parallel", "parallel"),
            vmem_limit_bytes=int(vmem_limit)),
        cost_estimate=pl.CostEstimate(flops=0, transcendentals=0,
                                      bytes_accessed=int(bytes_accessed)),
    )(x3)
    return out4.reshape(b, c * s * s, oh, ow)   # free reshape (leading dims only)


def pixelshuffle_down_reference(x, scale=2):
    """Pure-JAX reference mirroring the PyTorch forward (for verification)."""
    b, c, h, w = x.shape
    x = x[:, :, :h - h % scale, :w - w % scale]
    oh, ow = (h - h % scale) // scale, (w - w % scale) // scale
    x = x.reshape(b, c, oh, scale, ow, scale)
    return jnp.transpose(x, (0, 1, 3, 5, 2, 4)).reshape(b, c * scale * scale, oh, ow)


if __name__ == "__main__":
    key = jax.random.PRNGKey(0)
    k0, k1 = jax.random.split(key)

    # Primary test: shapes consistent with the module.
    b, c, h, w, scale = 2, 4, 16, 16, 2
    x = jax.random.normal(k0, (b, c, h, w), jnp.float32)
    fwd = jax.jit(functools.partial(pixelshuffle_down, scale=scale))
    out = fwd(x)
    jax.block_until_ready(out)
    assert out.shape == (b, c * scale * scale, h // scale, w // scale), out.shape
    assert bool(jnp.array_equal(out, pixelshuffle_down_reference(x, scale))), \
        "mismatch vs reference"

    # Secondary test: exercises the crop semantics (odd spatial size) without
    # any host-side crop copy.
    x2 = jax.random.normal(k1, (1, 4, 17, 17), jnp.float32)
    out2 = jax.jit(functools.partial(pixelshuffle_down, scale=scale))(x2)
    jax.block_until_ready(out2)
    assert out2.shape == (1, 4 * scale * scale, 8, 8), out2.shape
    assert bool(jnp.array_equal(out2, pixelshuffle_down_reference(x2, scale))), \
        "mismatch vs reference (crop case)"

    print("KERNEL_OK")
</pallas_src>

<mosaic_0001>
module attributes {stable_mosaic.version = 11 : i64} {
  func.func @_pixelshuffle_down_kernel(%arg0: i32, %arg1: i32, %arg2: memref<8x16x16xf32, #tpu.memory_space<vmem>>, %arg3: memref<8x4x8x8xf32, #tpu.memory_space<vmem>>, %arg4: memref<16x64xf32, #tpu.memory_space<vmem>>) attributes {dimension_semantics = [#tpu.dimension_semantics<parallel>, #tpu.dimension_semantics<parallel>], iteration_bounds = array<i64: 1, 1>, scalar_prefetch = 0 : i64, scratch_operands = 1 : i64, tpu.core_type = #tpu.core_type<tc>, window_params = [{transform_indices = @transform_0, window_bounds = array<i64: 8, 16, 16>}, {transform_indices = @transform_1, window_bounds = array<i64: 8, 4, 8, 8>}]} {
    %c0 = arith.constant 0 : index
    %c0_0 = arith.constant 0 : index
    %c0_1 = arith.constant 0 : index
    %0 = tpu.strided_load %arg2[%c0, %c0_0, %c0_1] {strides = array<i32: 1, 2, 1>} : memref<8x16x16xf32, #tpu.memory_space<vmem>>, vector<8x8x16xf32>
    %1 = vector.shape_cast %0 : vector<8x8x16xf32> to vector<64x16xf32>
    %2 = tpu.transpose %1, [1, 0] : vector<64x16xf32> -> vector<16x64xf32>
    %c0_2 = arith.constant 0 : index
    %c0_3 = arith.constant 0 : index
    %3 = vector.load %arg4[%c0_2, %c0_3] : memref<16x64xf32, #tpu.memory_space<vmem>>, vector<16x64xf32>
    tpu.vector_store %arg4[%c0_2, %c0_3], %2 {strides = array<i32>} : memref<16x64xf32, #tpu.memory_space<vmem>>, vector<16x64xf32>,
    %c0_4 = arith.constant 0 : index
    %c0_5 = arith.constant 0 : index
    %4 = tpu.strided_load %arg4[%c0_4, %c0_5] {strides = array<i32: 2, 1>} : memref<16x64xf32, #tpu.memory_space<vmem>>, vector<8x64xf32>
    %5 = tpu.transpose %4, [1, 0] : vector<8x64xf32> -> vector<64x8xf32>
    %6 = vector.shape_cast %5 : vector<64x8xf32> to vector<8x8x8xf32>
    %c0_6 = arith.constant 0 : index
    %c0_7 = arith.constant 0 : index
    %c0_8 = arith.constant 0 : index
    %c0_9 = arith.constant 0 : index
    %7 = vector.load %arg3[%c0_6, %c0_7, %c0_8, %c0_9] : memref<8x4x8x8xf32, #tpu.memory_space<vmem>>, vector<8x1x8x8xf32>
    %8 = vector.shape_cast %7 : vector<8x1x8x8xf32> to vector<8x8x8xf32>
    %9 = vector.shape_cast %6 : vector<8x8x8xf32> to vector<8x1x8x8xf32>
    tpu.vector_store %arg3[%c0_6, %c0_7, %c0_8, %c0_9], %9 {strides = array<i32>} : memref<8x4x8x8xf32, #tpu.memory_space<vmem>>, vector<8x1x8x8xf32>,
    %c1 = arith.constant 1 : index
    %c0_10 = arith.constant 0 : index
    %10 = tpu.strided_load %arg4[%c1, %c0_10] {strides = array<i32: 2, 1>} : memref<16x64xf32, #tpu.memory_space<vmem>>, vector<8x64xf32>
    %11 = tpu.transpose %10, [1, 0] : vector<8x64xf32> -> vector<64x8xf32>
    %12 = vector.shape_cast %11 : vector<64x8xf32> to vector<8x8x8xf32>
    %c0_11 = arith.constant 0 : index
    %c1_12 = arith.constant 1 : index
    %c0_13 = arith.constant 0 : index
    %c0_14 = arith.constant 0 : index
    %13 = vector.load %arg3[%c0_11, %c1_12, %c0_13, %c0_14] : memref<8x4x8x8xf32, #tpu.memory_space<vmem>>, vector<8x1x8x8xf32>
    %14 = vector.shape_cast %13 : vector<8x1x8x8xf32> to vector<8x8x8xf32>
    %15 = vector.shape_cast %12 : vector<8x8x8xf32> to vector<8x1x8x8xf32>
    tpu.vector_store %arg3[%c0_11, %c1_12, %c0_13, %c0_14], %15 {strides = array<i32>} : memref<8x4x8x8xf32, #tpu.memory_space<vmem>>, vector<8x1x8x8xf32>,
    %c0_15 = arith.constant 0 : index
    %c1_16 = arith.constant 1 : index
    %c0_17 = arith.constant 0 : index
    %16 = tpu.strided_load %arg2[%c0_15, %c1_16, %c0_17] {strides = array<i32: 1, 2, 1>} : memref<8x16x16xf32, #tpu.memory_space<vmem>>, vector<8x8x16xf32>
    %17 = vector.shape_cast %16 : vector<8x8x16xf32> to vector<64x16xf32>
    %18 = tpu.transpose %17, [1, 0] : vector<64x16xf32> -> vector<16x64xf32>
    %c0_18 = arith.constant 0 : index
    %c0_19 = arith.constant 0 : index
    %19 = vector.load %arg4[%c0_18, %c0_19] : memref<16x64xf32, #tpu.memory_space<vmem>>, vector<16x64xf32>
    tpu.vector_store %arg4[%c0_18, %c0_19], %18 {strides = array<i32>} : memref<16x64xf32, #tpu.memory_space<vmem>>, vector<16x64xf32>,
    %c0_20 = arith.constant 0 : index
    %c0_21 = arith.constant 0 : index
    %20 = tpu.strided_load %arg4[%c0_20, %c0_21] {strides = array<i32: 2, 1>} : memref<16x64xf32, #tpu.memory_space<vmem>>, vector<8x64xf32>
    %21 = tpu.transpose %20, [1, 0] : vector<8x64xf32> -> vector<64x8xf32>
    %22 = vector.shape_cast %21 : vector<64x8xf32> to vector<8x8x8xf32>
    %c0_22 = arith.constant 0 : index
    %c2 = arith.constant 2 : index
    %c0_23 = arith.constant 0 : index
    %c0_24 = arith.constant 0 : index
    %23 = vector.load %arg3[%c0_22, %c2, %c0_23, %c0_24] : memref<8x4x8x8xf32, #tpu.memory_space<vmem>>, vector<8x1x8x8xf32>
    %24 = vector.shape_cast %23 : vector<8x1x8x8xf32> to vector<8x8x8xf32>
    %25 = vector.shape_cast %22 : vector<8x8x8xf32> to vector<8x1x8x8xf32>
    tpu.vector_store %arg3[%c0_22, %c2, %c0_23, %c0_24], %25 {strides = array<i32>} : memref<8x4x8x8xf32, #tpu.memory_space<vmem>>, vector<8x1x8x8xf32>,
    %c1_25 = arith.constant 1 : index
    %c0_26 = arith.constant 0 : index
    %26 = tpu.strided_load %arg4[%c1_25, %c0_26] {strides = array<i32: 2, 1>} : memref<16x64xf32, #tpu.memory_space<vmem>>, vector<8x64xf32>
    %27 = tpu.transpose %26, [1, 0] : vector<8x64xf32> -> vector<64x8xf32>
    %28 = vector.shape_cast %27 : vector<64x8xf32> to vector<8x8x8xf32>
    %c0_27 = arith.constant 0 : index
    %c3 = arith.constant 3 : index
    %c0_28 = arith.constant 0 : index
    %c0_29 = arith.constant 0 : index
    %29 = vector.load %arg3[%c0_27, %c3, %c0_28, %c0_29] : memref<8x4x8x8xf32, #tpu.memory_space<vmem>>, vector<8x1x8x8xf32>
    %30 = vector.shape_cast %29 : vector<8x1x8x8xf32> to vector<8x8x8xf32>
    %31 = vector.shape_cast %28 : vector<8x8x8xf32> to vector<8x1x8x8xf32>
    tpu.vector_store %arg3[%c0_27, %c3, %c0_28, %c0_29], %31 {strides = array<i32>} : memref<8x4x8x8xf32, #tpu.memory_space<vmem>>, vector<8x1x8x8xf32>,
    return
  }
  func.func @transform_0(%arg0: i32, %arg1: i32) -> (i32, i32, i32) {
    %c0_i32 = arith.constant 0 : i32
    %c0_i32_0 = arith.constant 0 : i32
    return %arg0, %arg1, %c0_i32 : i32, i32, i32
  }
  func.func @transform_1(%arg0: i32, %arg1: i32) -> (i32, i32, i32, i32) {
    %c0_i32 = arith.constant 0 : i32
    %c0_i32_0 = arith.constant 0 : i32
    %c0_i32_1 = arith.constant 0 : i32
    return %arg0, %c0_i32, %arg1, %c0_i32_0 : i32, i32, i32, i32
  }
}

</mosaic_0001>

<llo_original>
// kernel: pixelshuffle_down.1
$region0: #{pixelshuffle_down.1}
  #allocation0 [shape = 'u32[]', space=smem, size = 0x4, offset = 0x4, fixed_abs, tag = 'smem constant byte address 0x4 - core index']
  #allocation1 [shape = 'u32[144,128]{1,0:T(1,128)}', space=vmem, size = 0x12000, scoped, tag = 'internal scratch']
  #allocation2 [shape = 'f32[16,64]{1,0:T(8,128)}', space=vmem, size = 0x2000, scoped, tag = 'scratch operand']
  %s0 = inlined_call_operand.hbm [shape: f32[8,16,16], index: 0, kind: input, shape index: {}]
  %s1 = inlined_call_operand.vmem [shape: f32[8,4,8,8], index: 1, kind: output, shape index: {}]
  %s2 = sld [smem:[#allocation0]]
  $region18: #{pixelshuffle_down.1} parent=0
    _
  %s4 = ssub.s32 1, %s2
  %s5 = scalar_select 0, %s4, %s2
  $region1: #{pixelshuffle_down.1} parent=0
    #allocation3 [shape = 'u8[65536]{0}', space=vmem, size = 0x10000, scoped, tag = 'input window, operand 0, single buffered']
    #allocation4 [shape = 's32[1]{0}', space=sflag, size = 0x4, scoped, tag = 'scoped memory for pixelshuffle_down.1']
    %6 = vsyncpa [#allocation4], 0
    // Predicated region
    $region2: #{pixelshuffle_down.1} parent=1 // pred_check
      _
    $region3: #{pixelshuffle_down.1} parent=1 // pred_check_branch
      %8 = sbr.rel (0) target = $region5
    $region4: #{pixelshuffle_down.1} parent=1 // pred_region
      %s10 = ssub.s32 2048, 2048
      %11 = vsyncadd [#allocation4], %s10
      %s12 = sshll.u32 [#allocation3], 4
      %s13 = int_to_ptr.vmem [resolvable:$true] %s12
      %18 = dma.hbm_to_vmem [thread:$0]  %s0, 2048, %s13, [#allocation4], 128, 128, 8
    $region5: #{pixelshuffle_down.1} parent=1 // pred_fallthru
      _
    // Predicated region
    $region6: #{pixelshuffle_down.1} parent=1 // pred_check
      _
    $region7: #{pixelshuffle_down.1} parent=1 // pred_check_branch
      %20 = sbr.rel (0) target = $region9
    $region8: #{pixelshuffle_down.1} parent=1 // pred_region
      %21 = dma.done [#allocation4], 2048
    $region9: #{pixelshuffle_down.1} parent=1 // pred_fallthru
      _
    %v22 = vld [vmem:[#allocation3] ss:$2 sm:$0xff]
    %s23 = scalar_lea.vmem [#allocation3], 16
    %v24 = vld [vmem:[%s23] ss:$2 sm:$0xff]
    %s25 = scalar_lea.vmem [#allocation3], 32
    %v26 = vld [vmem:[%s25] ss:$2 sm:$0xff]
    %s27 = scalar_lea.vmem [#allocation3], 48
    %v28 = vld [vmem:[%s27] ss:$2 sm:$0xff]
    %s29 = scalar_lea.vmem [#allocation3], 64
    %v30 = vld [vmem:[%s29] ss:$2 sm:$0xff]
    %s31 = scalar_lea.vmem [#allocation3], 80
    %v32 = vld [vmem:[%s31] ss:$2 sm:$0xff]
    %s33 = scalar_lea.vmem [#allocation3], 96
    %v34 = vld [vmem:[%s33] ss:$2 sm:$0xff]
    %s35 = scalar_lea.vmem [#allocation3], 112
    %v36 = vld [vmem:[%s35] ss:$2 sm:$0xff]
    %37 = vxpose.xlu0.b32.start [1/16] %v22, 128
    %38 = vxpose.xlu0.b32.cont [2/16] %v24, 128
    %39 = vxpose.xlu0.b32.cont [3/16] %v26, 128
    %40 = vxpose.xlu0.b32.cont [4/16] %v28, 128
    %41 = vxpose.xlu0.b32.cont [5/16] %v30, 128
    %42 = vxpose.xlu0.b32.cont [6/16] %v32, 128
    %43 = vxpose.xlu0.b32.cont [7/16] %v34, 128
    %44 = vxpose.xlu0.b32.cont [8/16] %v36, 128
    %45 = vxpose.xlu0.b32.cont [9/16] 0.0, 128
    %46 = vxpose.xlu0.b32.cont [10/16] 0.0, 128
    %47 = vxpose.xlu0.b32.cont [11/16] 0.0, 128
    %48 = vxpose.xlu0.b32.cont [12/16] 0.0, 128
    %49 = vxpose.xlu0.b32.cont [13/16] 0.0, 128
    %50 = vxpose.xlu0.b32.cont [14/16] 0.0, 128
    %51 = vxpose.xlu0.b32.cont [15/16] 0.0, 128
    %52 = vxpose.xlu0.b32.end [16/16] 0.0, 128
    %v53 = vpop.trf.xlu0
    %v54 = vpop.trf.xlu0
    %v55 = vpop.trf.xlu0
    %v56 = vpop.trf.xlu0
    %v57 = vpop.trf.xlu0
    %v58 = vpop.trf.xlu0
    %v59 = vpop.trf.xlu0
    %v60 = vpop.trf.xlu0
    %v61 = vpop.trf.xlu0
    %v62 = vpop.trf.xlu0
    %v63 = vpop.trf.xlu0
    %v64 = vpop.trf.xlu0
    %v65 = vpop.trf.xlu0
    %v66 = vpop.trf.xlu0
    %v67 = vpop.trf.xlu0
    %v68 = vpop.trf.xlu0
    %vm69 = vcmask 523264
    %70 = vst.msk [vmem:[#allocation2] sm:$0xff] %vm69, %v53
    %71 = vst.msk [vmem:[#allocation2 + $0x8] sm:$0xff] %vm69, %v54
    %v72 = vld [vmem:[#allocation2] ss:$2 sm:$0xff]
    %73 = vxpose.xlu0.b32.start [1/16] %v72, 128
    %74 = vxpose.xlu0.b32.cont [2/16] 0.0, 128
    %75 = vxpose.xlu0.b32.cont [3/16] 0.0, 128
    %76 = vxpose.xlu0.b32.cont [4/16] 0.0, 128
    %77 = vxpose.xlu0.b32.cont [5/16] 0.0, 128
    %78 = vxpose.xlu0.b32.cont [6/16] 0.0, 128
    %79 = vxpose.xlu0.b32.cont [7/16] 0.0, 128
    %80 = vxpose.xlu0.b32.cont [8/16] 0.0, 128
    %81 = vxpose.xlu0.b32.cont [9/16] 0.0, 128
    %82 = vxpose.xlu0.b32.cont [10/16] 0.0, 128
    %83 = vxpose.xlu0.b32.cont [11/16] 0.0, 128
    %84 = vxpose.xlu0.b32.cont [12/16] 0.0, 128
    %85 = vxpose.xlu0.b32.cont [13/16] 0.0, 128
    %86 = vxpose.xlu0.b32.cont [14/16] 0.0, 128
    %87 = vxpose.xlu0.b32.cont [15/16] 0.0, 128
    %88 = vxpose.xlu0.b32.end [16/16] 0.0, 128
    %v89 = vpop.trf.xlu0
    %v90 = vpop.trf.xlu0
    %v91 = vpop.trf.xlu0
    %v92 = vpop.trf.xlu0
    %v93 = vpop.trf.xlu0
    %v94 = vpop.trf.xlu0
    %v95 = vpop.trf.xlu0
    %v96 = vpop.trf.xlu0
    %v97 = vpop.trf.xlu0
    %v98 = vpop.trf.xlu0
    %v99 = vpop.trf.xlu0
    %v100 = vpop.trf.xlu0
    %v101 = vpop.trf.xlu0
    %v102 = vpop.trf.xlu0
    %v103 = vpop.trf.xlu0
    %v104 = vpop.trf.xlu0
    %vm105 = vcmask 64512
    %106 = vst.msk [vmem:[%s1] sm:$0xff] %vm105, %v89
    %107 = vst.msk [vmem:[%s1 + $0x20] sm:$0xff] %vm105, %v90
    %108 = vst.msk [vmem:[%s1 + $0x40] sm:$0xff] %vm105, %v91
    %109 = vst.msk [vmem:[%s1 + $0x60] sm:$0xff] %vm105, %v92
    %110 = vst.msk [vmem:[%s1 + $0x80] sm:$0xff] %vm105, %v93
    %111 = vst.msk [vmem:[%s1 + $0xa0] sm:$0xff] %vm105, %v94
    %112 = vst.msk [vmem:[%s1 + $0xc0] sm:$0xff] %vm105, %v95
    %113 = vst.msk [vmem:[%s1 + $0xe0] sm:$0xff] %vm105, %v96
    %s114 = scalar_lea.vmem [#allocation2], 1
    %v115 = vld [vmem:[%s114] ss:$2 sm:$0xff]
    %116 = vxpose.xlu0.b32.start [1/16] %v115, 128
    %117 = vxpose.xlu0.b32.cont [2/16] 0.0, 128
    %118 = vxpose.xlu0.b32.cont [3/16] 0.0, 128
    %119 = vxpose.xlu0.b32.cont [4/16] 0.0, 128
    %120 = vxpose.xlu0.b32.cont [5/16] 0.0, 128
    %121 = vxpose.xlu0.b32.cont [6/16] 0.0, 128
    %122 = vxpose.xlu0.b32.cont [7/16] 0.0, 128
    %123 = vxpose.xlu0.b32.cont [8/16] 0.0, 128
    %124 = vxpose.xlu0.b32.cont [9/16] 0.0, 128
    %125 = vxpose.xlu0.b32.cont [10/16] 0.0, 128
    %126 = vxpose.xlu0.b32.cont [11/16] 0.0, 128
    %127 = vxpose.xlu0.b32.cont [12/16] 0.0, 128
    %128 = vxpose.xlu0.b32.cont [13/16] 0.0, 128
    %129 = vxpose.xlu0.b32.cont [14/16] 0.0, 128
    %130 = vxpose.xlu0.b32.cont [15/16] 0.0, 128
    %131 = vxpose.xlu0.b32.end [16/16] 0.0, 128
    %v132 = vpop.trf.xlu0
    %v133 = vpop.trf.xlu0
    %v134 = vpop.trf.xlu0
    %v135 = vpop.trf.xlu0
    %v136 = vpop.trf.xlu0
    %v137 = vpop.trf.xlu0
    %v138 = vpop.trf.xlu0
    %v139 = vpop.trf.xlu0
    %v140 = vpop.trf.xlu0
    %v141 = vpop.trf.xlu0
    %v142 = vpop.trf.xlu0
    %v143 = vpop.trf.xlu0
    %v144 = vpop.trf.xlu0
    %v145 = vpop.trf.xlu0
    %v146 = vpop.trf.xlu0
    %v147 = vpop.trf.xlu0
    %s148 = scalar_lea.vmem %s1, 8
    %149 = vst.msk [vmem:[%s148] sm:$0xff] %vm105, %v132
    %150 = vst.msk [vmem:[%s148 + $0x20] sm:$0xff] %vm105, %v133
    %151 = vst.msk [vmem:[%s148 + $0x40] sm:$0xff] %vm105, %v134
    %152 = vst.msk [vmem:[%s148 + $0x60] sm:$0xff] %vm105, %v135
    %153 = vst.msk [vmem:[%s148 + $0x80] sm:$0xff] %vm105, %v136
    %154 = vst.msk [vmem:[%s148 + $0xa0] sm:$0xff] %vm105, %v137
    %155 = vst.msk [vmem:[%s148 + $0xc0] sm:$0xff] %vm105, %v138
    %156 = vst.msk [vmem:[%s148 + $0xe0] sm:$0xff] %vm105, %v139
    %s157 = scalar_lea.vmem [#allocation3], 1
    %v158 = vld [vmem:[%s157] ss:$2 sm:$0xff]
    %s159 = scalar_lea.vmem [#allocation3], 17
    %v160 = vld [vmem:[%s159] ss:$2 sm:$0xff]
    %s161 = scalar_lea.vmem [#allocation3], 33
    %v162 = vld [vmem:[%s161] ss:$2 sm:$0xff]
    %s163 = scalar_lea.vmem [#allocation3], 49
    %v164 = vld [vmem:[%s163] ss:$2 sm:$0xff]
    %s165 = scalar_lea.vmem [#allocation3], 65
    %v166 = vld [vmem:[%s165] ss:$2 sm:$0xff]
    %s167 = scalar_lea.vmem [#allocation3], 81
    %v168 = vld [vmem:[%s167] ss:$2 sm:$0xff]
    %s169 = scalar_lea.vmem [#allocation3], 97
    %v170 = vld [vmem:[%s169] ss:$2 sm:$0xff]
    %s171 = scalar_lea.vmem [#allocation3], 113
    %v172 = vld [vmem:[%s171] ss:$2 sm:$0xff]
    %173 = vxpose.xlu0.b32.start [1/16] %v158, 128
    %174 = vxpose.xlu0.b32.cont [2/16] %v160, 128
    %175 = vxpose.xlu0.b32.cont [3/16] %v162, 128
    %176 = vxpose.xlu0.b32.cont [4/16] %v164, 128
    %177 = vxpose.xlu0.b32.cont [5/16] %v166, 128
    %178 = vxpose.xlu0.b32.cont [6/16] %v168, 128
    %179 = vxpose.xlu0.b32.cont [7/16] %v170, 128
    %180 = vxpose.xlu0.b32.cont [8/16] %v172, 128
    %181 = vxpose.xlu0.b32.cont [9/16] 0.0, 128
    %182 = vxpose.xlu0.b32.cont [10/16] 0.0, 128
    %183 = vxpose.xlu0.b32.cont [11/16] 0.0, 128
    %184 = vxpose.xlu0.b32.cont [12/16] 0.0, 128
    %185 = vxpose.xlu0.b32.cont [13/16] 0.0, 128
    %186 = vxpose.xlu0.b32.cont [14/16] 0.0, 128
    %187 = vxpose.xlu0.b32.cont [15/16] 0.0, 128
    %188 = vxpose.xlu0.b32.end [16/16] 0.0, 128
    %v189 = vpop.trf.xlu0
    %v190 = vpop.trf.xlu0
    %v191 = vpop.trf.xlu0
    %v192 = vpop.trf.xlu0
    %v193 = vpop.trf.xlu0
    %v194 = vpop.trf.xlu0
    %v195 = vpop.trf.xlu0
    %v196 = vpop.trf.xlu0
    %v197 = vpop.trf.xlu0
    %v198 = vpop.trf.xlu0
    %v199 = vpop.trf.xlu0
    %v200 = vpop.trf.xlu0
    %v201 = vpop.trf.xlu0
    %v202 = vpop.trf.xlu0
    %v203 = vpop.trf.xlu0
    %v204 = vpop.trf.xlu0
    %205 = vst.msk [vmem:[#allocation2] sm:$0xff] %vm69, %v189
    %206 = vst.msk [vmem:[#allocation2 + $0x8] sm:$0xff] %vm69, %v190
    %v207 = vld [vmem:[#allocation2] ss:$2 sm:$0xff]
    %208 = vxpose.xlu0.b32.start [1/16] %v207, 128
    %209 = vxpose.xlu0.b32.cont [2/16] 0.0, 128
    %210 = vxpose.xlu0.b32.cont [3/16] 0.0, 128
    %211 = vxpose.xlu0.b32.cont [4/16] 0.0, 128
    %212 = vxpose.xlu0.b32.cont [5/16] 0.0, 128
    %213 = vxpose.xlu0.b32.cont [6/16] 0.0, 128
    %214 = vxpose.xlu0.b32.cont [7/16] 0.0, 128
    %215 = vxpose.xlu0.b32.cont [8/16] 0.0, 128
    %216 = vxpose.xlu0.b32.cont [9/16] 0.0, 128
    %217 = vxpose.xlu0.b32.cont [10/16] 0.0, 128
    %218 = vxpose.xlu0.b32.cont [11/16] 0.0, 128
    %219 = vxpose.xlu0.b32.cont [12/16] 0.0, 128
    %220 = vxpose.xlu0.b32.cont [13/16] 0.0, 128
    %221 = vxpose.xlu0.b32.cont [14/16] 0.0, 128
    %222 = vxpose.xlu0.b32.cont [15/16] 0.0, 128
    %223 = vxpose.xlu0.b32.end [16/16] 0.0, 128
    %v224 = vpop.trf.xlu0
    %v225 = vpop.trf.xlu0
    %v226 = vpop.trf.xlu0
    %v227 = vpop.trf.xlu0
    %v228 = vpop.trf.xlu0
    %v229 = vpop.trf.xlu0
    %v230 = vpop.trf.xlu0
    %v231 = vpop.trf.xlu0
    %v232 = vpop.trf.xlu0
    %v233 = vpop.trf.xlu0
    %v234 = vpop.trf.xlu0
    %v235 = vpop.trf.xlu0
    %v236 = vpop.trf.xlu0
    %v237 = vpop.trf.xlu0
    %v238 = vpop.trf.xlu0
    %v239 = vpop.trf.xlu0
    %s240 = scalar_lea.vmem %s1, 16
    %241 = vst.msk [vmem:[%s240] sm:$0xff] %vm105, %v224
    %242 = vst.msk [vmem:[%s240 + $0x20] sm:$0xff] %vm105, %v225
    %243 = vst.msk [vmem:[%s240 + $0x40] sm:$0xff] %vm105, %v226
    %244 = vst.msk [vmem:[%s240 + $0x60] sm:$0xff] %vm105, %v227
    %245 = vst.msk [vmem:[%s240 + $0x80] sm:$0xff] %vm105, %v228
    %246 = vst.msk [vmem:[%s240 + $0xa0] sm:$0xff] %vm105, %v229
    %247 = vst.msk [vmem:[%s240 + $0xc0] sm:$0xff] %vm105, %v230
    %248 = vst.msk [vmem:[%s240 + $0xe0] sm:$0xff] %vm105, %v231
    %v249 = vld [vmem:[%s114] ss:$2 sm:$0xff]
    %250 = vxpose.xlu0.b32.start [1/16] %v249, 128
    %251 = vxpose.xlu0.b32.cont [2/16] 0.0, 128
    %252 = vxpose.xlu0.b32.cont [3/16] 0.0, 128
    %253 = vxpose.xlu0.b32.cont [4/16] 0.0, 128
    %254 = vxpose.xlu0.b32.cont [5/16] 0.0, 128
    %255 = vxpose.xlu0.b32.cont [6/16] 0.0, 128
    %256 = vxpose.xlu0.b32.cont [7/16] 0.0, 128
    %257 = vxpose.xlu0.b32.cont [8/16] 0.0, 128
    %258 = vxpose.xlu0.b32.cont [9/16] 0.0, 128
    %259 = vxpose.xlu0.b32.cont [10/16] 0.0, 128
    %260 = vxpose.xlu0.b32.cont [11/16] 0.0, 128
    %261 = vxpose.xlu0.b32.cont [12/16] 0.0, 128
    %262 = vxpose.xlu0.b32.cont [13/16] 0.0, 128
    %263 = vxpose.xlu0.b32.cont [14/16] 0.0, 128
    %264 = vxpose.xlu0.b32.cont [15/16] 0.0, 128
    %265 = vxpose.xlu0.b32.end [16/16] 0.0, 128
    %v266 = vpop.trf.xlu0
    %v267 = vpop.trf.xlu0
    %v268 = vpop.trf.xlu0
    %v269 = vpop.trf.xlu0
    %v270 = vpop.trf.xlu0
    %v271 = vpop.trf.xlu0
    %v272 = vpop.trf.xlu0
    %v273 = vpop.trf.xlu0
    %v274 = vpop.trf.xlu0
    %v275 = vpop.trf.xlu0
    %v276 = vpop.trf.xlu0
    %v277 = vpop.trf.xlu0
    %v278 = vpop.trf.xlu0
    %v279 = vpop.trf.xlu0
    %v280 = vpop.trf.xlu0
    %v281 = vpop.trf.xlu0
    %s282 = scalar_lea.vmem %s1, 24
    %283 = vst.msk [vmem:[%s282] sm:$0xff] %vm105, %v266
    %284 = vst.msk [vmem:[%s282 + $0x20] sm:$0xff] %vm105, %v267
    %285 = vst.msk [vmem:[%s282 + $0x40] sm:$0xff] %vm105, %v268
    %286 = vst.msk [vmem:[%s282 + $0x60] sm:$0xff] %vm105, %v269
    %287 = vst.msk [vmem:[%s282 + $0x80] sm:$0xff] %vm105, %v270
    %288 = vst.msk [vmem:[%s282 + $0xa0] sm:$0xff] %vm105, %v271
    %289 = vst.msk [vmem:[%s282 + $0xc0] sm:$0xff] %vm105, %v272
    %290 = vst.msk [vmem:[%s282 + $0xe0] sm:$0xff] %vm105, %v273
    // Predicated region
    $region10: #{pixelshuffle_down.1} parent=1 // pred_check
      _
    $region11: #{pixelshuffle_down.1} parent=1 // pred_check_branch
      %292 = sbr.rel (0) target = $region13
    $region12: #{pixelshuffle_down.1} parent=1 // pred_region
      _
    $region13: #{pixelshuffle_down.1} parent=1 // pred_fallthru
      _
    // Predicated region
    $region14: #{pixelshuffle_down.1} parent=1 // pred_check
      _
    $region15: #{pixelshuffle_down.1} parent=1 // pred_check_branch
      %294 = sbr.rel (0) target = $region17
    $region16: #{pixelshuffle_down.1} parent=1 // pred_region
      _
    $region17: #{pixelshuffle_down.1} parent=1 // pred_fallthru
      _
    %295 = vsyncpa [#allocation4], 1

</llo_original>
